<compile_context>
chip_gen: v7x
topology: tpu7x:2x2x1
jax: 0.10.0
libtpu: 0.0.40
codegen_flags: <defaults>
</compile_context>

<pallas_src>
import jax
import jax.numpy as jnp
from jax.experimental import pallas as pl
from jax.experimental.pallas import tpu as pltpu


# ---------------------------------------------------------------------------
# Kernels
# ---------------------------------------------------------------------------
def _backsub_equal_kernel(lb_ref, ub_ref, w_ref, new_lb_ref, new_ub_ref,
                          acc_lb_ref, acc_ub_ref):
    """Specialized path for w_backsub_lb is w_backsub_ub (the module's case).

    relu(x) - relu(-x) == x, so the relu split cancels and each bound needs a
    single matmul per K tile.  Both dots reuse the same resident weight tile.
    """
    k = pl.program_id(2)

    @pl.when(k == 0)
    def _():
        acc_lb_ref[...] = jnp.zeros_like(acc_lb_ref)
        acc_ub_ref[...] = jnp.zeros_like(acc_ub_ref)

    w = w_ref[...]
    acc_lb_ref[...] += jnp.dot(lb_ref[...], w, preferred_element_type=jnp.float32)
    acc_ub_ref[...] += jnp.dot(ub_ref[...], w, preferred_element_type=jnp.float32)

    @pl.when(k == pl.num_programs(2) - 1)
    def _():
        new_lb_ref[...] = acc_lb_ref[...].astype(new_lb_ref.dtype)
        new_ub_ref[...] = acc_ub_ref[...].astype(new_ub_ref.dtype)


def _backsub_general_kernel(lb_ref, ub_ref, w_lb_ref, w_ub_ref,
                            new_lb_ref, new_ub_ref, acc_lb_ref, acc_ub_ref):
    """General path (distinct lb/ub back-substitution matrices).

    The relu split stays inside the kernel (VPU work co-issues with the MXU).
    """
    k = pl.program_id(2)

    @pl.when(k == 0)
    def _():
        acc_lb_ref[...] = jnp.zeros_like(acc_lb_ref)
        acc_ub_ref[...] = jnp.zeros_like(acc_ub_ref)

    lb = lb_ref[...]
    ub = ub_ref[...]
    w_lb = w_lb_ref[...]
    w_ub = w_ub_ref[...]

    lb_pos = jnp.maximum(lb, 0.0)
    lb_neg = jnp.maximum(-lb, 0.0)
    ub_pos = jnp.maximum(ub, 0.0)
    ub_neg = jnp.maximum(-ub, 0.0)

    acc_lb_ref[...] += (jnp.dot(lb_pos, w_lb, preferred_element_type=jnp.float32)
                        - jnp.dot(lb_neg, w_ub, preferred_element_type=jnp.float32))
    acc_ub_ref[...] += (jnp.dot(ub_pos, w_ub, preferred_element_type=jnp.float32)
                        - jnp.dot(ub_neg, w_lb, preferred_element_type=jnp.float32))

    @pl.when(k == pl.num_programs(2) - 1)
    def _():
        new_lb_ref[...] = acc_lb_ref[...].astype(new_lb_ref.dtype)
        new_ub_ref[...] = acc_ub_ref[...].astype(new_ub_ref.dtype)


# ---------------------------------------------------------------------------
# Tiling helpers
# ---------------------------------------------------------------------------
def _round_up(x, m):
    return ((x + m - 1) // m) * m


def _cdiv(a, b):
    return -(-a // b)


def _split_tile(dim, cap, align):
    """Aligned tile size for `dim` that minimizes padded work.

    Single-tile case returns the aligned full dim; multi-tile case splits into
    the fewest tiles of size <= cap, each a multiple of `align` (cap must be a
    multiple of `align`, guaranteed by the caller).
    """
    padded0 = _round_up(dim, align)
    if padded0 <= cap:
        return padded0
    ntiles = _cdiv(padded0, cap)
    return _round_up(_cdiv(dim, ntiles), align)


# ---------------------------------------------------------------------------
# Wrapper
# ---------------------------------------------------------------------------
def backsub_pallas(lb, ub, w_backsub_lb, w_backsub_ub, *, tb=256, tn=512, tk=512):
    """lb, ub: (B, K); w_backsub_*: (K, N) -> (new_lb, new_ub): (B, N)."""
    B, K = lb.shape
    Kw, N = w_backsub_lb.shape
    assert K == Kw and ub.shape == lb.shape and w_backsub_ub.shape == w_backsub_lb.shape

    equal_w = w_backsub_lb is w_backsub_ub
    dtype_bytes = jnp.dtype(lb.dtype).itemsize

    # Align the caps themselves (sublane 8, lane 128), then pick tiles.
    tb_cap = _round_up(max(tb, 8), 8)
    tn_cap = _round_up(max(tn, 128), 128)
    tk_cap = _round_up(max(tk, 128), 128)

    tb = _split_tile(B, tb_cap, 8)
    tn = _split_tile(N, tn_cap, 128)                    # lane-dense outputs
    # K: a single unpadded reduction step when it fits (block == full array dim
    # is legal and avoids wasted MXU rows); otherwise minimal-pad aligned split.
    tk = K if K <= tk_cap else _split_tile(K, tk_cap, 128)

    Bp = _round_up(B, tb)
    Np = _round_up(N, tn)
    Kp = _round_up(K, tk)

    def pad2(a, rows, cols):
        pr, pc = rows - a.shape[0], cols - a.shape[1]
        if pr == 0 and pc == 0:
            return a
        return jnp.pad(a, ((0, pr), (0, pc)))

    lb_p = pad2(lb, Bp, Kp)
    ub_p = pad2(ub, Bp, Kp)
    w_lb_p = pad2(w_backsub_lb, Kp, Np)

    grid = (Bp // tb, Np // tn, Kp // tk)               # K last = reduction axis

    lb_spec = pl.BlockSpec((tb, tk), lambda i, j, k: (i, k))
    w_spec = pl.BlockSpec((tk, tn), lambda i, j, k: (k, j))
    o_spec = pl.BlockSpec((tb, tn), lambda i, j, k: (i, j))

    scratch = [pltpu.VMEM((tb, tn), jnp.float32),
               pltpu.VMEM((tb, tn), jnp.float32)]

    compiler_params = pltpu.CompilerParams(
        dimension_semantics=("parallel", "parallel", "arbitrary"),
        vmem_limit_bytes=32 * 1024 * 1024,
    )

    out_shape = (jax.ShapeDtypeStruct((Bp, Np), lb.dtype),
                 jax.ShapeDtypeStruct((Bp, Np), lb.dtype))

    n_matmuls = 2 if equal_w else 4
    n_weights = 1 if equal_w else 2
    cost_estimate = pl.CostEstimate(
        flops=2 * n_matmuls * Bp * Np * Kp,
        transcendentals=0,
        bytes_accessed=(2 * Bp * Kp + n_weights * Kp * Np + 2 * Bp * Np) * dtype_bytes,
    )

    if equal_w:
        new_lb_p, new_ub_p = pl.pallas_call(
            _backsub_equal_kernel,
            grid=grid,
            in_specs=[lb_spec, lb_spec, w_spec],
            out_specs=(o_spec, o_spec),
            out_shape=out_shape,
            scratch_shapes=scratch,
            compiler_params=compiler_params,
            cost_estimate=cost_estimate,
        )(lb_p, ub_p, w_lb_p)
    else:
        w_ub_p = pad2(w_backsub_ub, Kp, Np)
        new_lb_p, new_ub_p = pl.pallas_call(
            _backsub_general_kernel,
            grid=grid,
            in_specs=[lb_spec, lb_spec, w_spec, w_spec],
            out_specs=(o_spec, o_spec),
            out_shape=out_shape,
            scratch_shapes=scratch,
            compiler_params=compiler_params,
            cost_estimate=cost_estimate,
        )(lb_p, ub_p, w_lb_p, w_ub_p)

    # Strip batch/N padding (padded K contributes exactly zero).
    if Bp == B and Np == N:
        return new_lb_p, new_ub_p
    return new_lb_p[:B, :N], new_ub_p[:B, :N]


# ---------------------------------------------------------------------------
# Module port (glue in plain JAX)
# ---------------------------------------------------------------------------
def construct_backsub_matrix(weight, bias):
    """JAX port of the PyTorch helper."""
    weight_cat_bias_lb = jnp.concatenate([weight, bias[:, None]], axis=1)
    weight_cat_bias_ub = weight_cat_bias_lb
    row = jnp.zeros((1, weight_cat_bias_lb.shape[1]), dtype=weight.dtype)
    row = row.at[0, -1].set(1.0)
    weight_cat_bias_backsub_lb = jnp.concatenate([weight_cat_bias_lb, row], axis=0)
    weight_cat_bias_backsub_ub = weight_cat_bias_backsub_lb   # same array (aliased)
    return (weight_cat_bias_backsub_lb, weight_cat_bias_backsub_ub,
            weight_cat_bias_lb, weight_cat_bias_ub)


class LinearTransformerPallas:
    def __init__(self, weight, bias):
        self.weight = weight
        self.bias = bias
        (self.weight_cat_bias_backsub_lb,
         self.weight_cat_bias_backsub_ub,
         self.weight_cat_bias_lb,
         self.weight_cat_bias_ub) = construct_backsub_matrix(weight, bias)

    def create_backsub_matrices(self, lb, ub, first_iteration=True):
        pass  # matches the PyTorch module (no-op)

    def forward(self, lb, ub):
        # The lb/ub backsub matrices are the same array -> specialized fast path.
        return backsub_pallas(lb, ub,
                              self.weight_cat_bias_backsub_lb,
                              self.weight_cat_bias_backsub_ub)

    def get_initial_backsub_matrices(self):
        return (self.weight_cat_bias_lb, self.weight_cat_bias_ub)


# ---------------------------------------------------------------------------
# Reference (pure JAX, relu-split form exactly as in PyTorch)
# ---------------------------------------------------------------------------
def _reference_backsub(lb, ub, w_lb, w_ub):
    lb_pos = jnp.maximum(lb, 0.0)
    lb_neg = jnp.maximum(-lb, 0.0)
    ub_pos = jnp.maximum(ub, 0.0)
    ub_neg = jnp.maximum(-ub, 0.0)
    new_lb = lb_pos @ w_lb - lb_neg @ w_ub
    new_ub = ub_pos @ w_ub - ub_neg @ w_lb
    return new_lb, new_ub


if __name__ == "__main__":
    key = jax.random.PRNGKey(0)
    (k_w, k_b, k_lb, k_gap,
     k_w2, k_b2, k_lb2, k_gap2, k_pert) = jax.random.split(key, 9)

    # --- Test 1: module-sized small problem (aliased backsub matrices) -------------
    in_features, out_features, batch = 31, 15, 8
    weight = jax.random.normal(k_w, (out_features, in_features), jnp.float32) * 0.1
    bias = jax.random.normal(k_b, (out_features,), jnp.float32) * 0.1
    mod = LinearTransformerPallas(weight, bias)

    K = out_features + 1
    lb = jax.random.normal(k_lb, (batch, K), jnp.float32)
    ub = lb + jnp.abs(jax.random.normal(k_gap, (batch, K), jnp.float32))

    new_lb, new_ub = mod.forward(lb, ub)
    jax.block_until_ready((new_lb, new_ub))

    ref_lb, ref_ub = _reference_backsub(lb, ub,
                                        mod.weight_cat_bias_backsub_lb,
                                        mod.weight_cat_bias_backsub_ub)
    assert new_lb.shape == (batch, in_features + 1)
    assert new_ub.shape == (batch, in_features + 1)
    assert jnp.allclose(new_lb, ref_lb, atol=1e-4, rtol=1e-4)
    assert jnp.allclose(new_ub, ref_ub, atol=1e-4, rtol=1e-4)

    # --- Test 2: multi-tile grid (K reduction over 2 tiles, parallel B/N tiles) ----
    in2, out2, b2 = 383, 255, 16            # K2 = 256, N2 = 384
    weight2 = jax.random.normal(k_w2, (out2, in2), jnp.float32) * 0.05
    bias2 = jax.random.normal(k_b2, (out2,), jnp.float32) * 0.05
    mod2 = LinearTransformerPallas(weight2, bias2)
    K2 = out2 + 1
    lb2 = jax.random.normal(k_lb2, (b2, K2), jnp.float32)
    ub2 = lb2 + jnp.abs(jax.random.normal(k_gap2, (b2, K2), jnp.float32))

    new_lb2, new_ub2 = backsub_pallas(lb2, ub2,
                                      mod2.weight_cat_bias_backsub_lb,
                                      mod2.weight_cat_bias_backsub_ub,
                                      tb=8, tn=128, tk=128)    # grid = (2, 3, 2)
    jax.block_until_ready((new_lb2, new_ub2))
    ref_lb2, ref_ub2 = _reference_backsub(lb2, ub2,
                                          mod2.weight_cat_bias_backsub_lb,
                                          mod2.weight_cat_bias_backsub_ub)
    assert jnp.allclose(new_lb2, ref_lb2, atol=5e-3, rtol=5e-3)
    assert jnp.allclose(new_ub2, ref_ub2, atol=5e-3, rtol=5e-3)

    # --- Test 3: general path (distinct lb/ub matrices -> relu-split kernel) -------
    w_lb_d = mod2.weight_cat_bias_backsub_lb
    w_ub_d = w_lb_d + 0.01 * jax.random.normal(k_pert, w_lb_d.shape, jnp.float32)
    glb, gub = backsub_pallas(lb2, ub2, w_lb_d, w_ub_d, tb=8, tn=128, tk=128)
    jax.block_until_ready((glb, gub))
    rlb, rub = _reference_backsub(lb2, ub2, w_lb_d, w_ub_d)
    assert jnp.allclose(glb, rlb, atol=5e-3, rtol=5e-3)
    assert jnp.allclose(gub, rub, atol=5e-3, rtol=5e-3)

    print("KERNEL_OK")
</pallas_src>

<mosaic_0001>
module attributes {stable_mosaic.version = 11 : i64} {
  func.func @_backsub_equal_kernel(%arg0: i32, %arg1: i32, %arg2: i32, %arg3: memref<8x16xf32, #tpu.memory_space<vmem>>, %arg4: memref<8x16xf32, #tpu.memory_space<vmem>>, %arg5: memref<16x128xf32, #tpu.memory_space<vmem>>, %arg6: memref<8x128xf32, #tpu.memory_space<vmem>>, %arg7: memref<8x128xf32, #tpu.memory_space<vmem>>, %arg8: memref<8x128xf32, #tpu.memory_space<vmem>>, %arg9: memref<8x128xf32, #tpu.memory_space<vmem>>) attributes {dimension_semantics = [#tpu.dimension_semantics<parallel>, #tpu.dimension_semantics<parallel>, #tpu.dimension_semantics<arbitrary>], iteration_bounds = array<i64: 1, 1, 1>, scalar_prefetch = 0 : i64, scratch_operands = 2 : i64, tpu.core_type = #tpu.core_type<tc>, window_params = [{transform_indices = @transform_0, window_bounds = array<i64: 8, 16>}, {transform_indices = @transform_1, window_bounds = array<i64: 8, 16>}, {transform_indices = @transform_2, window_bounds = array<i64: 16, 128>}, {transform_indices = @transform_3, window_bounds = array<i64: 8, 128>}, {transform_indices = @transform_4, window_bounds = array<i64: 8, 128>}]} {
    %c0_i32 = arith.constant 0 : i32
    %0 = arith.cmpi eq, %arg2, %c0_i32 : i32
    %1 = arith.extui %0 : i1 to i32
    %c0_i32_0 = arith.constant 0 : i32
    %2 = arith.cmpi ne, %1, %c0_i32_0 : i32
    scf.if %2 {
      %cst_17 = arith.constant 0.000000e+00 : f32
      %17 = vector.broadcast %cst_17 : f32 to vector<8x128xf32>
      %c0_18 = arith.constant 0 : index
      %c0_19 = arith.constant 0 : index
      %18 = vector.load %arg8[%c0_18, %c0_19] : memref<8x128xf32, #tpu.memory_space<vmem>>, vector<8x128xf32>
      tpu.vector_store %arg8[%c0_18, %c0_19], %17 {strides = array<i32>} : memref<8x128xf32, #tpu.memory_space<vmem>>, vector<8x128xf32>,
      %cst_20 = arith.constant 0.000000e+00 : f32
      %19 = vector.broadcast %cst_20 : f32 to vector<8x128xf32>
      %c0_21 = arith.constant 0 : index
      %c0_22 = arith.constant 0 : index
      %20 = vector.load %arg9[%c0_21, %c0_22] : memref<8x128xf32, #tpu.memory_space<vmem>>, vector<8x128xf32>
      tpu.vector_store %arg9[%c0_21, %c0_22], %19 {strides = array<i32>} : memref<8x128xf32, #tpu.memory_space<vmem>>, vector<8x128xf32>,
    } else {
    }
    %c0 = arith.constant 0 : index
    %c0_1 = arith.constant 0 : index
    %3 = vector.load %arg5[%c0, %c0_1] : memref<16x128xf32, #tpu.memory_space<vmem>>, vector<16x128xf32>
    %c0_2 = arith.constant 0 : index
    %c0_3 = arith.constant 0 : index
    %4 = vector.load %arg8[%c0_2, %c0_3] : memref<8x128xf32, #tpu.memory_space<vmem>>, vector<8x128xf32>
    %c0_4 = arith.constant 0 : index
    %c0_5 = arith.constant 0 : index
    %5 = vector.load %arg3[%c0_4, %c0_5] : memref<8x16xf32, #tpu.memory_space<vmem>>, vector<8x16xf32>
    %cst = arith.constant dense<0.000000e+00> : vector<8x128xf32>
    %6 = tpu.matmul %5, %3, %cst {dimension_numbers = #tpu.dot_dimension_numbers<[1], [0], [0], [1], [0, 0, 1, 1], [], []>} : vector<8x16xf32>, vector<16x128xf32>, vector<8x128xf32> -> vector<8x128xf32>
    %7 = arith.addf %4, %6 : vector<8x128xf32>
    %c0_6 = arith.constant 0 : index
    %c0_7 = arith.constant 0 : index
    %8 = vector.load %arg8[%c0_6, %c0_7] : memref<8x128xf32, #tpu.memory_space<vmem>>, vector<8x128xf32>
    tpu.vector_store %arg8[%c0_6, %c0_7], %7 {strides = array<i32>} : memref<8x128xf32, #tpu.memory_space<vmem>>, vector<8x128xf32>,
    %c0_8 = arith.constant 0 : index
    %c0_9 = arith.constant 0 : index
    %9 = vector.load %arg9[%c0_8, %c0_9] : memref<8x128xf32, #tpu.memory_space<vmem>>, vector<8x128xf32>
    %c0_10 = arith.constant 0 : index
    %c0_11 = arith.constant 0 : index
    %10 = vector.load %arg4[%c0_10, %c0_11] : memref<8x16xf32, #tpu.memory_space<vmem>>, vector<8x16xf32>
    %cst_12 = arith.constant dense<0.000000e+00> : vector<8x128xf32>
    %11 = tpu.matmul %10, %3, %cst_12 {dimension_numbers = #tpu.dot_dimension_numbers<[1], [0], [0], [1], [0, 0, 1, 1], [], []>} : vector<8x16xf32>, vector<16x128xf32>, vector<8x128xf32> -> vector<8x128xf32>
    %12 = arith.addf %9, %11 : vector<8x128xf32>
    %c0_13 = arith.constant 0 : index
    %c0_14 = arith.constant 0 : index
    %13 = vector.load %arg9[%c0_13, %c0_14] : memref<8x128xf32, #tpu.memory_space<vmem>>, vector<8x128xf32>
    tpu.vector_store %arg9[%c0_13, %c0_14], %12 {strides = array<i32>} : memref<8x128xf32, #tpu.memory_space<vmem>>, vector<8x128xf32>,
    %c0_i32_15 = arith.constant 0 : i32
    %14 = arith.cmpi eq, %arg2, %c0_i32_15 : i32
    %15 = arith.extui %14 : i1 to i32
    %c0_i32_16 = arith.constant 0 : i32
    %16 = arith.cmpi ne, %15, %c0_i32_16 : i32
    scf.if %16 {
      %c0_17 = arith.constant 0 : index
      %c0_18 = arith.constant 0 : index
      %17 = vector.load %arg8[%c0_17, %c0_18] : memref<8x128xf32, #tpu.memory_space<vmem>>, vector<8x128xf32>
      %c0_19 = arith.constant 0 : index
      %c0_20 = arith.constant 0 : index
      %18 = vector.load %arg6[%c0_19, %c0_20] : memref<8x128xf32, #tpu.memory_space<vmem>>, vector<8x128xf32>
      tpu.vector_store %arg6[%c0_19, %c0_20], %17 {strides = array<i32>} : memref<8x128xf32, #tpu.memory_space<vmem>>, vector<8x128xf32>,
      %c0_21 = arith.constant 0 : index
      %c0_22 = arith.constant 0 : index
      %19 = vector.load %arg9[%c0_21, %c0_22] : memref<8x128xf32, #tpu.memory_space<vmem>>, vector<8x128xf32>
      %c0_23 = arith.constant 0 : index
      %c0_24 = arith.constant 0 : index
      %20 = vector.load %arg7[%c0_23, %c0_24] : memref<8x128xf32, #tpu.memory_space<vmem>>, vector<8x128xf32>
      tpu.vector_store %arg7[%c0_23, %c0_24], %19 {strides = array<i32>} : memref<8x128xf32, #tpu.memory_space<vmem>>, vector<8x128xf32>,
    } else {
    }
    return
  }
  func.func @transform_0(%arg0: i32, %arg1: i32, %arg2: i32) -> (i32, i32) {
    %c0_i32 = arith.constant 0 : i32
    return %arg0, %arg2 : i32, i32
  }
  func.func @transform_1(%arg0: i32, %arg1: i32, %arg2: i32) -> (i32, i32) {
    %c0_i32 = arith.constant 0 : i32
    return %arg0, %arg2 : i32, i32
  }
  func.func @transform_2(%arg0: i32, %arg1: i32, %arg2: i32) -> (i32, i32) {
    %c0_i32 = arith.constant 0 : i32
    return %arg2, %arg1 : i32, i32
  }
  func.func @transform_3(%arg0: i32, %arg1: i32, %arg2: i32) -> (i32, i32) {
    %c0_i32 = arith.constant 0 : i32
    return %arg0, %arg1 : i32, i32
  }
  func.func @transform_4(%arg0: i32, %arg1: i32, %arg2: i32) -> (i32, i32) {
    %c0_i32 = arith.constant 0 : i32
    return %arg0, %arg1 : i32, i32
  }
}

</mosaic_0001>

<llo_original>
// kernel: tpu_custom_call.1
$region0: #{tpu_custom_call.1}
  #allocation0 [shape = 'u32[]', space=smem, size = 0x4, offset = 0x4, fixed_abs, tag = 'smem constant byte address 0x4 - core index']
  #allocation1 [shape = 'u32[144,128]{1,0:T(1,128)}', space=vmem, size = 0x12000, scoped, tag = 'internal scratch']
  #allocation2 [shape = 'f32[8,128]{1,0:T(8,128)}', space=vmem, size = 0x1000, scoped, tag = 'scratch operand']
  #allocation3 [shape = 'f32[8,128]{1,0:T(8,128)}', space=vmem, size = 0x1000, scoped, tag = 'scratch operand']
  %s0 = inlined_call_operand.hbm [shape: f32[8,16], index: 0, kind: input, shape index: {}]
  %s1 = inlined_call_operand.hbm [shape: f32[8,16], index: 1, kind: input, shape index: {}]
  %s2 = inlined_call_operand.hbm [shape: f32[16,128], index: 2, kind: input, shape index: {}]
  %s3 = inlined_call_operand.hbm [shape: f32[8,128], index: 3, kind: output, shape index: {0}]
  %s4 = inlined_call_operand.hbm [shape: f32[8,128], index: 4, kind: output, shape index: {1}]
  %5 = xla_tuple %s3, %s4
  %s6 = sld [smem:[#allocation0]]
  $region50: #{tpu_custom_call.1} parent=0
    _
  %s8 = ssub.s32 1, %s6
  %s9 = scalar_select 0, %s8, %s6
  $region1: #{tpu_custom_call.1} parent=0
    #allocation4 [shape = 'u8[4096]{0}', space=vmem, size = 0x1000, scoped, tag = 'input window, operand 0, single buffered']
    #allocation5 [shape = 's32[1]{0}', space=sflag, size = 0x4, scoped, tag = 'scoped memory for tpu_custom_call.1']
    #allocation6 [shape = 's32[1]{0}', space=sflag, size = 0x4, scoped, tag = 'scoped memory for tpu_custom_call.1']
    #allocation7 [shape = 'u8[4096]{0}', space=vmem, size = 0x1000, scoped, tag = 'input window, operand 1, single buffered']
    #allocation8 [shape = 's32[1]{0}', space=sflag, size = 0x4, scoped, tag = 'scoped memory for tpu_custom_call.1']
    #allocation9 [shape = 'u8[8192]{0}', space=vmem, size = 0x2000, scoped, tag = 'input window, operand 2, single buffered']
    #allocation10 [shape = 'u8[4096]{0}', space=vmem, size = 0x1000, scoped, tag = 'output window, operand 0, single buffered']
    #allocation11 [shape = 'u8[4096]{0}', space=vmem, size = 0x1000, scoped, tag = 'output window, operand 1, single buffered']
    #allocation12 [shape = 's32[1]{0}', space=sflag, size = 0x4, scoped, tag = 'scoped memory for tpu_custom_call.1']
    %10 = vsyncpa [#allocation5], 0
    %11 = vsyncpa [#allocation8], 0
    %12 = vsyncpa [#allocation6], 0
    %13 = vsyncpa [#allocation12], 0
    // Predicated region
    $region2: #{tpu_custom_call.1} parent=1 // pred_check
      _
    $region3: #{tpu_custom_call.1} parent=1 // pred_check_branch
      %15 = sbr.rel (0) target = $region5
    $region4: #{tpu_custom_call.1} parent=1 // pred_region
      %s17 = ssub.s32 128, 128
      %18 = vsyncadd [#allocation5], %s17
      %s20 = sshll.u32 [#allocation4], 4
      %s21 = int_to_ptr.vmem [resolvable:$true] %s20
      %23 = dma.hbm_to_vmem [thread:$0]  %s0, 128, %s21, [#allocation5]
    $region5: #{tpu_custom_call.1} parent=1 // pred_fallthru
      _
    // Predicated region
    $region6: #{tpu_custom_call.1} parent=1 // pred_check
      _
    $region7: #{tpu_custom_call.1} parent=1 // pred_check_branch
      %25 = sbr.rel (0) target = $region9
    $region8: #{tpu_custom_call.1} parent=1 // pred_region
      %s27 = ssub.s32 128, 128
      %28 = vsyncadd [#allocation8], %s27
      %s30 = sshll.u32 [#allocation7], 4
      %s31 = int_to_ptr.vmem [resolvable:$true] %s30
      %33 = dma.hbm_to_vmem [thread:$0]  %s1, 128, %s31, [#allocation8]
    $region9: #{tpu_custom_call.1} parent=1 // pred_fallthru
      _
    // Predicated region
    $region10: #{tpu_custom_call.1} parent=1 // pred_check
      _
    $region11: #{tpu_custom_call.1} parent=1 // pred_check_branch
      %35 = sbr.rel (0) target = $region13
    $region12: #{tpu_custom_call.1} parent=1 // pred_region
      %s37 = ssub.s32 256, 256
      %38 = vsyncadd [#allocation8], %s37
      %s39 = sshll.u32 [#allocation9], 4
      %s40 = int_to_ptr.vmem [resolvable:$true] %s39
      %45 = dma.hbm_to_vmem [thread:$0]  %s2, 256, %s40, [#allocation8], 128, 128, 8
    $region13: #{tpu_custom_call.1} parent=1 // pred_fallthru
      _
    // Predicated region
    $region14: #{tpu_custom_call.1} parent=1 // pred_check
      _
    $region15: #{tpu_custom_call.1} parent=1 // pred_check_branch
      %47 = sbr.rel (0) target = $region17
    $region16: #{tpu_custom_call.1} parent=1 // pred_region
      %48 = dma.done [#allocation5], 128
    $region17: #{tpu_custom_call.1} parent=1 // pred_fallthru
      _
    // Predicated region
    $region18: #{tpu_custom_call.1} parent=1 // pred_check
      _
    $region19: #{tpu_custom_call.1} parent=1 // pred_check_branch
      %50 = sbr.rel (0) target = $region21
    $region20: #{tpu_custom_call.1} parent=1 // pred_region
      %51 = dma.done [#allocation8], 128
    $region21: #{tpu_custom_call.1} parent=1 // pred_fallthru
      _
    // Predicated region
    $region22: #{tpu_custom_call.1} parent=1 // pred_check
      _
    $region23: #{tpu_custom_call.1} parent=1 // pred_check_branch
      %53 = sbr.rel (0) target = $region25
    $region24: #{tpu_custom_call.1} parent=1 // pred_region
      %54 = dma.done [#allocation8], 256
    $region25: #{tpu_custom_call.1} parent=1 // pred_fallthru
      _
    %p55 = scmp.eq.s32.totalorder 0, 0
    // Predicated region
    $region26: #{tpu_custom_call.1} parent=1 // pred_check
      %p56 = pneg %p55
    $region27: #{tpu_custom_call.1} parent=1 // pred_check_branch
      %58 = sbr.rel (%p56) target = $region29
    $region28: #{tpu_custom_call.1} parent=1 // pred_region
      %59 = vst [vmem:[#allocation2] sm:$0xff] 0.0
      %60 = vst [vmem:[#allocation3] sm:$0xff] 0.0
    $region29: #{tpu_custom_call.1} parent=1 // pred_fallthru
      _
    %v61 = vld [vmem:[#allocation9] sm:$0xff]
    %v62 = vld [vmem:[#allocation9 + $0x8] sm:$0xff]
    %v63 = vld [vmem:[#allocation2] sm:$0xff]
    %v64 = vld [vmem:[#allocation4] sm:$0xff]
    %vm65 = vcmask 130048
    %v67 = vsel %vm65, %v64, 0
    %69 = vmatprep.subr.mxu0 0.0
    %70 = vmatpush1.msra.mxu0 %v61
    %71 = vmatprep.subr.mxu0 0.0
    %72 = vmatpush1.msra.mxu0 %v62
    %73 = vmatprep.subr.mxu0 0.0
    %74 = vmatpush1.msra.mxu0 0.0
    %75 = vmatprep.subr.mxu0 0.0
    %76 = vmatpush1.msra.mxu0 0.0
    %77 = vmatprep.subr.mxu0 0.0
    %78 = vmatpush1.msra.mxu0 0.0
    %79 = vmatprep.subr.mxu0 0.0
    %80 = vmatpush1.msra.mxu0 0.0
    %81 = vmatprep.subr.mxu0 0.0
    %82 = vmatpush1.msra.mxu0 0.0
    %83 = vmatprep.subr.mxu0 0.0
    %84 = vmatpush1.msra.mxu0 0.0
    %85 = vmatprep.subr.mxu0 0.0
    %86 = vmatpush1.msra.mxu0 0.0
    %87 = vmatprep.subr.mxu0 0.0
    %88 = vmatpush1.msra.mxu0 0.0
    %89 = vmatprep.subr.mxu0 0.0
    %90 = vmatpush1.msra.mxu0 0.0
    %91 = vmatprep.subr.mxu0 0.0
    %92 = vmatpush1.msra.mxu0 0.0
    %93 = vmatprep.subr.mxu0 0.0
    %94 = vmatpush1.msra.mxu0 0.0
    %95 = vmatprep.subr.mxu0 0.0
    %96 = vmatpush1.msra.mxu0 0.0
    %97 = vmatprep.subr.mxu0 0.0
    %98 = vmatpush1.msra.mxu0 0.0
    %99 = vmatprep.subr.mxu0 0.0
    %100 = vmatpush1.msra.mxu0 0.0
    %101 = vmatprep.subr.mxu0 0.0
    %102 = vmatpush1.msra.mxu0 0.0
    %103 = vmatprep.subr.mxu0 0.0
    %104 = vmatpush1.msra.mxu0 0.0
    %105 = vmatprep.subr.mxu0 0.0
    %106 = vmatpush1.msra.mxu0 0.0
    %107 = vmatprep.subr.mxu0 0.0
    %108 = vmatpush1.msra.mxu0 0.0
    %109 = vmatprep.subr.mxu0 0.0
    %110 = vmatpush1.msra.mxu0 0.0
    %111 = vmatprep.subr.mxu0 0.0
    %112 = vmatpush1.msra.mxu0 0.0
    %113 = vmatprep.subr.mxu0 0.0
    %114 = vmatpush1.msra.mxu0 0.0
    %115 = vmatprep.subr.mxu0 0.0
    %116 = vmatpush1.msra.mxu0 0.0
    %117 = vmatprep.subr.mxu0 0.0
    %118 = vmatpush1.msra.mxu0 0.0
    %119 = vmatprep.subr.mxu0 0.0
    %120 = vmatpush1.msra.mxu0 0.0
    %121 = vmatprep.subr.mxu0 0.0
    %122 = vmatpush1.msra.mxu0 0.0
    %123 = vmatprep.subr.mxu0 0.0
    %124 = vmatpush1.msra.mxu0 0.0
    %125 = vmatprep.subr.mxu0 0.0
    %126 = vmatpush1.msra.mxu0 0.0
    %127 = vmatprep.subr.mxu0 0.0
    %128 = vmatpush1.msra.mxu0 0.0
    %129 = vmatprep.subr.mxu0 0.0
    %130 = vmatpush1.msra.mxu0 0.0
    %131 = vmatprep.subr.mxu0 0.0
    %132 = vmatpush1.msra.mxu0 0.0
    %133 = vmatprep.mubr.f32.mxu0 0.0
    %134 = vmatmul.mubr.f32.gmra.mrb[0].mxu0 %v67
    %v135 = vpop.f32.mrb[0].mxu0
    %v136 = vadd.f32 0.0, %v135
    %v137 = vpop.f32.mrb[0].mxu0
    %138 = vdwg.mxu0
    %v139 = vadd.f32 %v63, %v136
    %140 = vst [vmem:[#allocation2] sm:$0xff] %v139
    %v141 = vld [vmem:[#allocation3] sm:$0xff]
    %v142 = vld [vmem:[#allocation7] sm:$0xff]
    %v144 = vsel %vm65, %v142, 0
    %146 = vmatprep.subr.mxu0 0.0
    %147 = vmatpush1.msra.mxu0 %v61
    %148 = vmatprep.subr.mxu0 0.0
    %149 = vmatpush1.msra.mxu0 %v62
    %150 = vmatprep.subr.mxu0 0.0
    %151 = vmatpush1.msra.mxu0 0.0
    %152 = vmatprep.subr.mxu0 0.0
    %153 = vmatpush1.msra.mxu0 0.0
    %154 = vmatprep.subr.mxu0 0.0
    %155 = vmatpush1.msra.mxu0 0.0
    %156 = vmatprep.subr.mxu0 0.0
    %157 = vmatpush1.msra.mxu0 0.0
    %158 = vmatprep.subr.mxu0 0.0
    %159 = vmatpush1.msra.mxu0 0.0
    %160 = vmatprep.subr.mxu0 0.0
    %161 = vmatpush1.msra.mxu0 0.0
    %162 = vmatprep.subr.mxu0 0.0
    %163 = vmatpush1.msra.mxu0 0.0
    %164 = vmatprep.subr.mxu0 0.0
    %165 = vmatpush1.msra.mxu0 0.0
    %166 = vmatprep.subr.mxu0 0.0
    %167 = vmatpush1.msra.mxu0 0.0
    %168 = vmatprep.subr.mxu0 0.0
    %169 = vmatpush1.msra.mxu0 0.0
    %170 = vmatprep.subr.mxu0 0.0
    %171 = vmatpush1.msra.mxu0 0.0
    %172 = vmatprep.subr.mxu0 0.0
    %173 = vmatpush1.msra.mxu0 0.0
    %174 = vmatprep.subr.mxu0 0.0
    %175 = vmatpush1.msra.mxu0 0.0
    %176 = vmatprep.subr.mxu0 0.0
    %177 = vmatpush1.msra.mxu0 0.0
    %178 = vmatprep.subr.mxu0 0.0
    %179 = vmatpush1.msra.mxu0 0.0
    %180 = vmatprep.subr.mxu0 0.0
    %181 = vmatpush1.msra.mxu0 0.0
    %182 = vmatprep.subr.mxu0 0.0
    %183 = vmatpush1.msra.mxu0 0.0
    %184 = vmatprep.subr.mxu0 0.0
    %185 = vmatpush1.msra.mxu0 0.0
    %186 = vmatprep.subr.mxu0 0.0
    %187 = vmatpush1.msra.mxu0 0.0
    %188 = vmatprep.subr.mxu0 0.0
    %189 = vmatpush1.msra.mxu0 0.0
    %190 = vmatprep.subr.mxu0 0.0
    %191 = vmatpush1.msra.mxu0 0.0
    %192 = vmatprep.subr.mxu0 0.0
    %193 = vmatpush1.msra.mxu0 0.0
    %194 = vmatprep.subr.mxu0 0.0
    %195 = vmatpush1.msra.mxu0 0.0
    %196 = vmatprep.subr.mxu0 0.0
    %197 = vmatpush1.msra.mxu0 0.0
    %198 = vmatprep.subr.mxu0 0.0
    %199 = vmatpush1.msra.mxu0 0.0
    %200 = vmatprep.subr.mxu0 0.0
    %201 = vmatpush1.msra.mxu0 0.0
    %202 = vmatprep.subr.mxu0 0.0
    %203 = vmatpush1.msra.mxu0 0.0
    %204 = vmatprep.subr.mxu0 0.0
    %205 = vmatpush1.msra.mxu0 0.0
    %206 = vmatprep.subr.mxu0 0.0
    %207 = vmatpush1.msra.mxu0 0.0
    %208 = vmatprep.subr.mxu0 0.0
    %209 = vmatpush1.msra.mxu0 0.0
    %210 = vmatprep.mubr.f32.mxu0 0.0
    %211 = vmatmul.mubr.f32.gmra.mrb[0].mxu0 %v144
    %v212 = vpop.f32.mrb[0].mxu0
    %v213 = vadd.f32 0.0, %v212
    %v214 = vpop.f32.mrb[0].mxu0
    %215 = vdwg.mxu0
    %v216 = vadd.f32 %v141, %v213
    %217 = vst [vmem:[#allocation3] sm:$0xff] %v216
    // Predicated region
    $region30: #{tpu_custom_call.1} parent=1 // pred_check
      %p218 = pneg %p55
    $region31: #{tpu_custom_call.1} parent=1 // pred_check_branch
      %220 = sbr.rel (%p218) target = $region33
    $region32: #{tpu_custom_call.1} parent=1 // pred_region
      %v221 = vld [vmem:[#allocation2] sm:$0xff]
      %222 = vst [vmem:[#allocation10] sm:$0xff] %v221
      %v223 = vld [vmem:[#allocation3] sm:$0xff]
      %224 = vst [vmem:[#allocation11] sm:$0xff] %v223
    $region33: #{tpu_custom_call.1} parent=1 // pred_fallthru
      _
    // Predicated region
    $region34: #{tpu_custom_call.1} parent=1 // pred_check
      _
    $region35: #{tpu_custom_call.1} parent=1 // pred_check_branch
      %226 = sbr.rel (0) target = $region37
    $region36: #{tpu_custom_call.1} parent=1 // pred_region
      %s228 = ssub.s32 128, 128
      %229 = vsyncadd [#allocation6], %s228
      %s231 = sshll.u32 [#allocation10], 4
      %s232 = int_to_ptr.vmem [resolvable:$true] %s231
      %234 = dma.vmem_to_hbm [thread:$0]  %s232, 128, %s3, [#allocation6]
    $region37: #{tpu_custom_call.1} parent=1 // pred_fallthru
      _
    // Predicated region
    $region38: #{tpu_custom_call.1} parent=1 // pred_check
      _
    $region39: #{tpu_custom_call.1} parent=1 // pred_check_branch
      %236 = sbr.rel (0) target = $region41
    $region40: #{tpu_custom_call.1} parent=1 // pred_region
      %s238 = ssub.s32 128, 128
      %239 = vsyncadd [#allocation12], %s238
      %s241 = sshll.u32 [#allocation11], 4
      %s242 = int_to_ptr.vmem [resolvable:$true] %s241
      %244 = dma.vmem_to_hbm [thread:$0]  %s242, 128, %s4, [#allocation12]
    $region41: #{tpu_custom_call.1} parent=1 // pred_fallthru
      _
    // Predicated region
    $region42: #{tpu_custom_call.1} parent=1 // pred_check
      _
    $region43: #{tpu_custom_call.1} parent=1 // pred_check_branch
      %246 = sbr.rel (0) target = $region45
    $region44: #{tpu_custom_call.1} parent=1 // pred_region
      %247 = dma.done [#allocation6], 128
    $region45: #{tpu_custom_call.1} parent=1 // pred_fallthru
      _
    // Predicated region
    $region46: #{tpu_custom_call.1} parent=1 // pred_check
      _
    $region47: #{tpu_custom_call.1} parent=1 // pred_check_branch
      %249 = sbr.rel (0) target = $region49
    $region48: #{tpu_custom_call.1} parent=1 // pred_region
      %250 = dma.done [#allocation12], 128
    $region49: #{tpu_custom_call.1} parent=1 // pred_fallthru
      _
    %251 = vsyncpa [#allocation5], 1
    %252 = vsyncpa [#allocation8], 1
    %253 = vsyncpa [#allocation6], 1
    %254 = vsyncpa [#allocation12], 1

</llo_original>
